<compile_context>
chip_gen: v5e
topology: v5e:2x2
jax: 0.10.0
libtpu: 0.0.40
codegen_flags: <defaults>
</compile_context>

<pallas_src>
import jax
import jax.numpy as jnp
from jax.experimental import pallas as pl
from jax.experimental.pallas import tpu as pltpu

EPS = 1e-15  # `eps` global from the original Loss.py (undefined in the snippet)


def _cdiv(a, b):
    return (a + b - 1) // b


def _round_up(x, m):
    return _cdiv(x, m) * m


def _sublane_multiple(dtype):
    # Minimum second-minor tile multiple per dtype: f32 -> 8, bf16/f16 -> 16, 1-byte -> 32.
    return max(8, 32 // jnp.dtype(dtype).itemsize)


def _tile_budget():
    # (per-input tile bytes, scoped VMEM limit). Bigger tiles on v7x to amortize the
    # ~0.35 us per-grid-step overhead against ~3.2 TB/s HBM; 2 inputs x 2 pipeline
    # buffers x 4 MiB = 16 MiB still leaves plenty of the 64 MiB v7x VMEM.
    try:
        kind = jax.devices()[0].device_kind.lower()
    except Exception:
        kind = ""
    if "v7" in kind:
        return 4 * 1024 * 1024, 48 * 1024 * 1024
    return 2 * 1024 * 1024, 32 * 1024 * 1024


def bce_dice_loss(logits, target):
    """logits, target: (N, ...) float arrays. Returns scalar f32 loss.

    Equivalent to BCEDiceLoss(size_average=True)(logits, target, weight=None).
    """
    # TODO(synk): optional per-element `weight` argument not implemented.
    n = logits.shape[0]
    d = 1
    for s in logits.shape[1:]:
        d *= s

    sub = max(_sublane_multiple(logits.dtype), _sublane_multiple(target.dtype))
    itemsize = max(jnp.dtype(logits.dtype).itemsize, jnp.dtype(target.dtype).itemsize)
    tile_bytes, vmem_limit = _tile_budget()

    # ---- fold D into rows for small batches (free reshape, keeps cols lane-dense) ----
    rows, cols, g = n, d, 1
    while rows < 2 * sub and cols % 256 == 0:
        g *= 2
        rows *= 2
        cols //= 2

    x2 = logits.reshape(rows, cols)   # native dtype; cast to f32 happens in-kernel
    t2 = target.reshape(rows, cols)

    # ---- tile selection ----
    if rows < sub:
        tn = rows                                    # full-dim block (allowed)
    else:
        # >= 2 blocks on the parallel axis when possible (v7x megacore), multiple of sub.
        tn = min(64, max(sub, _round_up(_cdiv(rows, 2), sub)))
    if cols <= 128:
        td = cols                                    # full-dim block below one lane tile
    else:
        td_cap = max(128, (tile_bytes // (tn * itemsize)) // 128 * 128)
        td = min(_round_up(cols, 128), td_cap)

    grid = (_cdiv(rows, tn), _cdiv(cols, td))
    need_col_mask = (cols % td) != 0

    def kernel(x_ref, t_ref, bce_out, pt_out, s_out):
        k = pl.program_id(1)

        @pl.when(k == 0)
        def _init():
            bce_out[...] = jnp.zeros_like(bce_out)
            pt_out[...] = jnp.zeros_like(pt_out)
            s_out[...] = jnp.zeros_like(s_out)

        x = x_ref[...].astype(jnp.float32)
        t = t_ref[...].astype(jnp.float32)

        # Stable BCEWithLogits: max(x,0) - x*t + log(1 + exp(-|x|))  (exp, log1p -> EUP)
        e = jnp.exp(-jnp.abs(x))
        bce = jnp.maximum(x, 0.0) - x * t + jnp.log1p(e)
        # sigmoid via tanh (EUP): keeps the per-element divide off the VALU.
        p = 0.5 * jnp.tanh(0.5 * x) + 0.5

        if need_col_mask:
            # Only the last k block has invalid lanes; the compare is trivially true
            # elsewhere. Invalid rows need no mask (their partials are clipped on
            # writeback and never read).
            valid = jax.lax.broadcasted_iota(jnp.int32, (tn, td), 1) < (cols - k * td)
            bce = jnp.where(valid, bce, 0.0)
            p = jnp.where(valid, p, 0.0)
            t = jnp.where(valid, t, 0.0)

        # Per-row (lane-axis) partials, accumulated directly into the VMEM-resident
        # output blocks across the reduction axis.
        bce_out[...] += jnp.sum(bce, axis=1, keepdims=True)
        pt_out[...] += jnp.sum(p * t, axis=1, keepdims=True)
        s_out[...] += jnp.sum(p + t, axis=1, keepdims=True)

    row_spec = pl.BlockSpec((tn, 1), lambda i, k: (i, 0))
    row_shape = jax.ShapeDtypeStruct((rows, 1), jnp.float32)

    bce_rows, pt_rows, s_rows = pl.pallas_call(
        kernel,
        out_shape=(row_shape, row_shape, row_shape),
        grid_spec=pltpu.PrefetchScalarGridSpec(
            num_scalar_prefetch=0,
            grid=grid,
            in_specs=[
                pl.BlockSpec((tn, td), lambda i, k: (i, k)),
                pl.BlockSpec((tn, td), lambda i, k: (i, k)),
            ],
            out_specs=[row_spec, row_spec, row_spec],
        ),
        compiler_params=pltpu.CompilerParams(
            dimension_semantics=("parallel", "arbitrary"),
            vmem_limit_bytes=vmem_limit,
        ),
    )(x2, t2)

    # ---- tiny O(N) combine in plain JAX (outside the hot loop) ----
    row_pt = pt_rows[:, 0]
    row_s = s_rows[:, 0]
    if g > 1:
        row_pt = row_pt.reshape(n, g).sum(axis=1)
        row_s = row_s.reshape(n, g).sum(axis=1)

    bce = jnp.sum(bce_rows) / (n * d)
    intersection = row_pt + EPS
    scores = 2.0 * (intersection + 1.0) / (row_s + 1.0)
    dice_score = jnp.clip(jnp.sum(scores) / n, 0.0, 1.0)
    return bce + (1.0 - dice_score)


def _reference(logits, target):
    # pure-JAX reference for sanity checking
    n = logits.shape[0]
    x = logits.reshape(n, -1).astype(jnp.float32)
    t = target.reshape(n, -1).astype(jnp.float32)
    bce = jnp.mean(jnp.maximum(x, 0.0) - x * t + jnp.log1p(jnp.exp(-jnp.abs(x))))
    p = jax.nn.sigmoid(x)
    inter = jnp.sum(p * t, axis=1) + EPS
    scores = 2.0 * (inter + 1.0) / (jnp.sum(p, axis=1) + jnp.sum(t, axis=1) + 1.0)
    dice_score = jnp.clip(jnp.mean(scores), 0.0, 1.0)
    return bce + (1.0 - dice_score)


if __name__ == "__main__":
    key = jax.random.PRNGKey(0)
    k1, k2 = jax.random.split(key)
    N, C, H, W = 2, 4, 16, 16
    logits = jax.random.normal(k1, (N, C, H, W), dtype=jnp.float32)
    target = (jax.random.uniform(k2, (N, C, H, W)) > 0.5).astype(jnp.float32)

    loss = jax.block_until_ready(bce_dice_loss(logits, target))
    ref = jax.block_until_ready(_reference(logits, target))
    assert jnp.allclose(loss, ref, rtol=1e-4, atol=1e-4), (loss, ref)
    print("KERNEL_OK")
</pallas_src>

<mosaic_0001>
module attributes {stable_mosaic.version = 11 : i64} {
  func.func @kernel(%arg0: i32, %arg1: i32, %arg2: memref<8x128xf32, #tpu.memory_space<vmem>>, %arg3: memref<8x128xf32, #tpu.memory_space<vmem>>, %arg4: memref<8x1xf32, #tpu.memory_space<vmem>>, %arg5: memref<8x1xf32, #tpu.memory_space<vmem>>, %arg6: memref<8x1xf32, #tpu.memory_space<vmem>>) attributes {dimension_semantics = [#tpu.dimension_semantics<parallel>, #tpu.dimension_semantics<arbitrary>], iteration_bounds = array<i64: 2, 1>, scalar_prefetch = 0 : i64, scratch_operands = 0 : i64, tpu.core_type = #tpu.core_type<tc>, window_params = [{transform_indices = @transform_0, window_bounds = array<i64: 8, 128>}, {transform_indices = @transform_1, window_bounds = array<i64: 8, 128>}, {transform_indices = @transform_2, window_bounds = array<i64: 8, 1>}, {transform_indices = @transform_3, window_bounds = array<i64: 8, 1>}, {transform_indices = @transform_4, window_bounds = array<i64: 8, 1>}]} {
    %c0_i32 = arith.constant 0 : i32
    %0 = arith.cmpi eq, %arg1, %c0_i32 : i32
    %1 = arith.extui %0 : i1 to i32
    %c0_i32_0 = arith.constant 0 : i32
    %2 = arith.cmpi ne, %1, %c0_i32_0 : i32
    scf.if %2 {
      %cst_23 = arith.constant 0.000000e+00 : f32
      %39 = vector.broadcast %cst_23 : f32 to vector<8x1xf32>
      %c0_24 = arith.constant 0 : index
      %c0_25 = arith.constant 0 : index
      %40 = vector.load %arg4[%c0_24, %c0_25] : memref<8x1xf32, #tpu.memory_space<vmem>>, vector<8x1xf32>
      tpu.vector_store %arg4[%c0_24, %c0_25], %39 {strides = array<i32>} : memref<8x1xf32, #tpu.memory_space<vmem>>, vector<8x1xf32>,
      %cst_26 = arith.constant 0.000000e+00 : f32
      %41 = vector.broadcast %cst_26 : f32 to vector<8x1xf32>
      %c0_27 = arith.constant 0 : index
      %c0_28 = arith.constant 0 : index
      %42 = vector.load %arg5[%c0_27, %c0_28] : memref<8x1xf32, #tpu.memory_space<vmem>>, vector<8x1xf32>
      tpu.vector_store %arg5[%c0_27, %c0_28], %41 {strides = array<i32>} : memref<8x1xf32, #tpu.memory_space<vmem>>, vector<8x1xf32>,
      %cst_29 = arith.constant 0.000000e+00 : f32
      %43 = vector.broadcast %cst_29 : f32 to vector<8x1xf32>
      %c0_30 = arith.constant 0 : index
      %c0_31 = arith.constant 0 : index
      %44 = vector.load %arg6[%c0_30, %c0_31] : memref<8x1xf32, #tpu.memory_space<vmem>>, vector<8x1xf32>
      tpu.vector_store %arg6[%c0_30, %c0_31], %43 {strides = array<i32>} : memref<8x1xf32, #tpu.memory_space<vmem>>, vector<8x1xf32>,
    } else {
    }
    %c0 = arith.constant 0 : index
    %c0_1 = arith.constant 0 : index
    %3 = vector.load %arg2[%c0, %c0_1] : memref<8x128xf32, #tpu.memory_space<vmem>>, vector<8x128xf32>
    %c0_2 = arith.constant 0 : index
    %c0_3 = arith.constant 0 : index
    %4 = vector.load %arg3[%c0_2, %c0_3] : memref<8x128xf32, #tpu.memory_space<vmem>>, vector<8x128xf32>
    %5 = math.absf %3 : vector<8x128xf32>
    %cst = arith.constant 0.000000e+00 : f32
    %6 = vector.broadcast %cst : f32 to vector<8x128xf32>
    %7 = arith.subf %6, %5 : vector<8x128xf32>
    %8 = math.exp %7 : vector<8x128xf32>
    %cst_4 = arith.constant 0.000000e+00 : f32
    %9 = vector.broadcast %cst_4 : f32 to vector<8x128xf32>
    %10 = arith.maximumf %3, %9 : vector<8x128xf32>
    %11 = arith.mulf %3, %4 : vector<8x128xf32>
    %12 = arith.subf %10, %11 : vector<8x128xf32>
    %13 = math.log1p %8 : vector<8x128xf32>
    %14 = arith.addf %12, %13 : vector<8x128xf32>
    %cst_5 = arith.constant 5.000000e-01 : f32
    %15 = vector.broadcast %cst_5 : f32 to vector<8x128xf32>
    %16 = arith.mulf %15, %3 : vector<8x128xf32>
    %17 = math.tanh %16 : vector<8x128xf32>
    %cst_6 = arith.constant 5.000000e-01 : f32
    %18 = vector.broadcast %cst_6 : f32 to vector<8x128xf32>
    %19 = arith.mulf %18, %17 : vector<8x128xf32>
    %cst_7 = arith.constant 5.000000e-01 : f32
    %20 = vector.broadcast %cst_7 : f32 to vector<8x128xf32>
    %21 = arith.addf %19, %20 : vector<8x128xf32>
    %c0_8 = arith.constant 0 : index
    %c0_9 = arith.constant 0 : index
    %22 = vector.load %arg4[%c0_8, %c0_9] : memref<8x1xf32, #tpu.memory_space<vmem>>, vector<8x1xf32>
    %cst_10 = arith.constant dense<0.000000e+00> : vector<8xf32>
    %23 = vector.multi_reduction <add>, %14, %cst_10 [1] : vector<8x128xf32> to vector<8xf32>
    %24 = vector.shape_cast %23 : vector<8xf32> to vector<8x1xf32>
    %25 = arith.addf %22, %24 : vector<8x1xf32>
    %c0_11 = arith.constant 0 : index
    %c0_12 = arith.constant 0 : index
    %26 = vector.load %arg4[%c0_11, %c0_12] : memref<8x1xf32, #tpu.memory_space<vmem>>, vector<8x1xf32>
    tpu.vector_store %arg4[%c0_11, %c0_12], %25 {strides = array<i32>} : memref<8x1xf32, #tpu.memory_space<vmem>>, vector<8x1xf32>,
    %c0_13 = arith.constant 0 : index
    %c0_14 = arith.constant 0 : index
    %27 = vector.load %arg5[%c0_13, %c0_14] : memref<8x1xf32, #tpu.memory_space<vmem>>, vector<8x1xf32>
    %28 = arith.mulf %21, %4 : vector<8x128xf32>
    %cst_15 = arith.constant dense<0.000000e+00> : vector<8xf32>
    %29 = vector.multi_reduction <add>, %28, %cst_15 [1] : vector<8x128xf32> to vector<8xf32>
    %30 = vector.shape_cast %29 : vector<8xf32> to vector<8x1xf32>
    %31 = arith.addf %27, %30 : vector<8x1xf32>
    %c0_16 = arith.constant 0 : index
    %c0_17 = arith.constant 0 : index
    %32 = vector.load %arg5[%c0_16, %c0_17] : memref<8x1xf32, #tpu.memory_space<vmem>>, vector<8x1xf32>
    tpu.vector_store %arg5[%c0_16, %c0_17], %31 {strides = array<i32>} : memref<8x1xf32, #tpu.memory_space<vmem>>, vector<8x1xf32>,
    %c0_18 = arith.constant 0 : index
    %c0_19 = arith.constant 0 : index
    %33 = vector.load %arg6[%c0_18, %c0_19] : memref<8x1xf32, #tpu.memory_space<vmem>>, vector<8x1xf32>
    %34 = arith.addf %21, %4 : vector<8x128xf32>
    %cst_20 = arith.constant dense<0.000000e+00> : vector<8xf32>
    %35 = vector.multi_reduction <add>, %34, %cst_20 [1] : vector<8x128xf32> to vector<8xf32>
    %36 = vector.shape_cast %35 : vector<8xf32> to vector<8x1xf32>
    %37 = arith.addf %33, %36 : vector<8x1xf32>
    %c0_21 = arith.constant 0 : index
    %c0_22 = arith.constant 0 : index
    %38 = vector.load %arg6[%c0_21, %c0_22] : memref<8x1xf32, #tpu.memory_space<vmem>>, vector<8x1xf32>
    tpu.vector_store %arg6[%c0_21, %c0_22], %37 {strides = array<i32>} : memref<8x1xf32, #tpu.memory_space<vmem>>, vector<8x1xf32>,
    return
  }
  func.func @transform_0(%arg0: i32, %arg1: i32) -> (i32, i32) {
    %c0_i32 = arith.constant 0 : i32
    return %arg0, %arg1 : i32, i32
  }
  func.func @transform_1(%arg0: i32, %arg1: i32) -> (i32, i32) {
    %c0_i32 = arith.constant 0 : i32
    return %arg0, %arg1 : i32, i32
  }
  func.func @transform_2(%arg0: i32, %arg1: i32) -> (i32, i32) {
    %c0_i32 = arith.constant 0 : i32
    %c0_i32_0 = arith.constant 0 : i32
    return %arg0, %c0_i32 : i32, i32
  }
  func.func @transform_3(%arg0: i32, %arg1: i32) -> (i32, i32) {
    %c0_i32 = arith.constant 0 : i32
    %c0_i32_0 = arith.constant 0 : i32
    return %arg0, %c0_i32 : i32, i32
  }
  func.func @transform_4(%arg0: i32, %arg1: i32) -> (i32, i32) {
    %c0_i32 = arith.constant 0 : i32
    %c0_i32_0 = arith.constant 0 : i32
    return %arg0, %c0_i32 : i32, i32
  }
}

</mosaic_0001>

<llo_original>
// kernel: tpu_custom_call.1
$region0: #{tpu_custom_call.1}
  #allocation0 [shape = 'u32[]', space=smem, size = 0x4, offset = 0x4, fixed_abs, tag = 'smem constant byte address 0x4 - core index']
  #allocation1 [shape = 'u32[72,128]{1,0:T(1,128)}', space=vmem, size = 0x9000, scoped, tag = 'internal scratch']
  %s0 = inlined_call_operand.hbm [shape: f32[16,128], index: 0, kind: input, shape index: {}]
  %s1 = inlined_call_operand.hbm [shape: f32[16,128], index: 1, kind: input, shape index: {}]
  %s2 = inlined_call_operand.vmem [shape: f32[16,1], index: 2, kind: output, shape index: {0}]
  %s3 = inlined_call_operand.vmem [shape: f32[16,1], index: 3, kind: output, shape index: {1}]
  %s4 = inlined_call_operand.vmem [shape: f32[16,1], index: 4, kind: output, shape index: {2}]
  %5 = xla_tuple %s2, %s3, %s4
  %s6 = sld [smem:[#allocation0]]
  $region69: #{tpu_custom_call.1} parent=0
    _
  %s8 = ssub.s32 1, %s6
  %s9 = scalar_select 0, %s8, %s6
  $region1: #{tpu_custom_call.1} parent=0
    #allocation2 [shape = 'u8[8192]{0}', space=vmem, size = 0x2000, scoped, tag = 'input window, operand 0']
    #allocation3 [shape = 's32[2]{0}', space=sflag, size = 0x8, scoped, tag = 'scoped memory for tpu_custom_call.1']
    #allocation4 [shape = 'u8[8192]{0}', space=vmem, size = 0x2000, scoped, tag = 'input window, operand 1']
    #allocation5 [shape = 's32[2]{0}', space=sflag, size = 0x8, scoped, tag = 'scoped memory for tpu_custom_call.1']
    %10 = vsyncpa [#allocation3], 0
    %s11 = scalar_lea.sflag [#allocation3], 1
    %12 = vsyncpa %s11, 0
    %13 = vsyncpa [#allocation5], 0
    %s14 = scalar_lea.sflag [#allocation5], 1
    %15 = vsyncpa %s14, 0
    loop: start=0, step=1, limit=4
    $region2: #{tpu_custom_call.1} parent=1 // loop_pre_header
      _
    $region3: #{tpu_custom_call.1} parent=1 // loop_header
      %s17 = sphi 0, %s21
      %p18 = scmp.ge.s32.totalorder %s17, 4
      %s24 = sphi 0, %s36
      %s25 = sphi 0, %s32
      %s26 = sphi 0, %s24
      %s27 = sphi 0, %s25
      %s28 = sphi 0, %s26
      %s29 = sphi 0, %s27
      %s41 = sphi 0, %s43
      %s44 = sphi 0, %s41
      %s45 = sphi 0, %s44
      %s61 = sphi 0, %s45
      %s69 = sphi 0, %s71
      %s72 = sphi 0, %s69
      %s73 = sphi 0, %s72
      %s89 = sphi 0, %s73
      %s95 = sphi 0, %s97
      %s98 = sphi 0, %s95
      %s99 = sphi 0, %s98
      %s115 = sphi 0, %s99
      %s121 = sphi 0, %s123
      %s124 = sphi 0, %s121
      %s125 = sphi 0, %s124
      %s141 = sphi 0, %s125
      %s147 = sphi 0, %s149
      %s150 = sphi 0, %s147
      %s151 = sphi 0, %s150
      %s167 = sphi 0, %s151
    $region4: #{tpu_custom_call.1} parent=1 // loop_header_branch
      %20 = sbr.rel (%p18) target = $region8
    $region5: #{tpu_custom_call.1} parent=1 // loop_body
      %s22 = ssub.s32 %s17, 1
      %s23 = ssub.s32 %s17, 2
      %s30 = sadd.s32 1, %s25
      %p31 = scmp.ge.s32.totalorder %s30, 1
      %s32 = scalar_select %p31, 0, %s30
      %s33 = sadd.s32 1, %s24
      %s34 = scalar_select %p31, %s33, %s24
      %p35 = scmp.ge.s32.totalorder %s34, 2
      %s36 = scalar_select %p35, 0, %s34
      %s37 = ssub.s32 %s24, %s36
      %s38 = ssub.s32 %s25, %s32
      %s39 = sor.u32 %s37, %s38
      %p40 = scmp.eq.s32.totalorder %s39, 0
      %s42 = sadd.s32 %s41, 1
      %s43 = scalar_select %p40, %s41, %s42
      %p46 = pneg %p40
      %p47 = scmp.eq.s32.totalorder %s17, 1
      %p48 = por %p46, %p47
      %p49 = scmp.ne.s32.totalorder %s41, %s44
      %p50 = scmp.eq.s32.totalorder %s17, 0
      %p51 = por %p49, %p50
      %p52 = scmp.ne.s32.totalorder %s41, %s44
      %p53 = scmp.eq.s32.totalorder %s22, 1
      %p54 = por %p52, %p53
      %p55 = scmp.ne.s32.totalorder %s44, %s45
      %p56 = scmp.eq.s32.totalorder %s22, 0
      %p57 = por %p55, %p56
      %p58 = scmp.ne.s32.totalorder %s44, %s45
      %p59 = scmp.eq.s32.totalorder %s23, 1
      %p60 = por %p58, %p59
      %p62 = scmp.ne.s32.totalorder %s45, %s61
      %p63 = scmp.eq.s32.totalorder %s23, 0
      %p64 = por %p62, %p63
      %s65 = ssub.s32 %s24, %s36
      %s66 = ssub.s32 %s25, %s32
      %s67 = sor.u32 %s65, %s66
      %p68 = scmp.eq.s32.totalorder %s67, 0
      %s70 = sadd.s32 %s69, 1
      %s71 = scalar_select %p68, %s69, %s70
      %p74 = pneg %p68
      %p75 = scmp.eq.s32.totalorder %s17, 1
      %p76 = por %p74, %p75
      %p77 = scmp.ne.s32.totalorder %s69, %s72
      %p78 = scmp.eq.s32.totalorder %s17, 0
      %p79 = por %p77, %p78
      %p80 = scmp.ne.s32.totalorder %s69, %s72
      %p81 = scmp.eq.s32.totalorder %s22, 1
      %p82 = por %p80, %p81
      %p83 = scmp.ne.s32.totalorder %s72, %s73
      %p84 = scmp.eq.s32.totalorder %s22, 0
      %p85 = por %p83, %p84
      %p86 = scmp.ne.s32.totalorder %s72, %s73
      %p87 = scmp.eq.s32.totalorder %s23, 1
      %p88 = por %p86, %p87
      %p90 = scmp.ne.s32.totalorder %s73, %s89
      %p91 = scmp.eq.s32.totalorder %s23, 0
      %p92 = por %p90, %p91
      %s93 = ssub.s32 %s24, %s36
      %p94 = scmp.eq.s32.totalorder %s93, 0
      %s96 = sadd.s32 %s95, 1
      %s97 = scalar_select %p94, %s95, %s96
      %p100 = pneg %p94
      %p101 = scmp.eq.s32.totalorder %s17, 1
      %p102 = por %p100, %p101
      %p103 = scmp.ne.s32.totalorder %s95, %s98
      %p104 = scmp.eq.s32.totalorder %s17, 0
      %p105 = por %p103, %p104
      %p106 = scmp.ne.s32.totalorder %s95, %s98
      %p107 = scmp.eq.s32.totalorder %s22, 1
      %p108 = por %p106, %p107
      %p109 = scmp.ne.s32.totalorder %s98, %s99
      %p110 = scmp.eq.s32.totalorder %s22, 0
      %p111 = por %p109, %p110
      %p112 = scmp.ne.s32.totalorder %s98, %s99
      %p113 = scmp.eq.s32.totalorder %s23, 1
      %p114 = por %p112, %p113
      %p116 = scmp.ne.s32.totalorder %s99, %s115
      %p117 = scmp.eq.s32.totalorder %s23, 0
      %p118 = por %p116, %p117
      %s119 = ssub.s32 %s24, %s36
      %p120 = scmp.eq.s32.totalorder %s119, 0
      %s122 = sadd.s32 %s121, 1
      %s123 = scalar_select %p120, %s121, %s122
      %p126 = pneg %p120
      %p127 = scmp.eq.s32.totalorder %s17, 1
      %p128 = por %p126, %p127
      %p129 = scmp.ne.s32.totalorder %s121, %s124
      %p130 = scmp.eq.s32.totalorder %s17, 0
      %p131 = por %p129, %p130
      %p132 = scmp.ne.s32.totalorder %s121, %s124
      %p133 = scmp.eq.s32.totalorder %s22, 1
      %p134 = por %p132, %p133
      %p135 = scmp.ne.s32.totalorder %s124, %s125
      %p136 = scmp.eq.s32.totalorder %s22, 0
      %p137 = por %p135, %p136
      %p138 = scmp.ne.s32.totalorder %s124, %s125
      %p139 = scmp.eq.s32.totalorder %s23, 1
      %p140 = por %p138, %p139
      %p142 = scmp.ne.s32.totalorder %s125, %s141
      %p143 = scmp.eq.s32.totalorder %s23, 0
      %p144 = por %p142, %p143
      %s145 = ssub.s32 %s24, %s36
      %p146 = scmp.eq.s32.totalorder %s145, 0
      %s148 = sadd.s32 %s147, 1
      %s149 = scalar_select %p146, %s147, %s148
      %p152 = pneg %p146
      %p153 = scmp.eq.s32.totalorder %s17, 1
      %p154 = por %p152, %p153
      %p155 = scmp.ne.s32.totalorder %s147, %s150
      %p156 = scmp.eq.s32.totalorder %s17, 0
      %p157 = por %p155, %p156
      %p158 = scmp.ne.s32.totalorder %s147, %s150
      %p159 = scmp.eq.s32.totalorder %s22, 1
      %p160 = por %p158, %p159
      %p161 = scmp.ne.s32.totalorder %s150, %s151
      %p162 = scmp.eq.s32.totalorder %s22, 0
      %p163 = por %p161, %p162
      %p164 = scmp.ne.s32.totalorder %s150, %s151
      %p165 = scmp.eq.s32.totalorder %s23, 1
      %p166 = por %p164, %p165
      %p168 = scmp.ne.s32.totalorder %s151, %s167
      %p169 = scmp.eq.s32.totalorder %s23, 0
      %p170 = por %p168, %p169
      %p171 = scmp.le.s32.totalorder 1, %s17
      %p172 = scmp.lt.s32.totalorder %s17, 3
      %p173 = pnand %p171, %p172
      %p174 = pneg %p173
      // Predicated region
      $region9: #{tpu_custom_call.1} parent=5 // pred_check
        _
      $region10: #{tpu_custom_call.1} parent=5 // pred_check_branch
        %176 = sbr.rel (%p173) target = $region12
      $region11: #{tpu_custom_call.1} parent=5 // pred_region
        %s177 = ssub.s32 %s17, 1
      $region12: #{tpu_custom_call.1} parent=5 // pred_fallthru
        _
      %p178 = scmp.lt.s32.totalorder %s17, 2
      // Predicated region
      $region13: #{tpu_custom_call.1} parent=5 // pred_check
        %p179 = pneg %p178
      $region14: #{tpu_custom_call.1} parent=5 // pred_check_branch
        %181 = sbr.rel (%p179) target = $region16
      $region15: #{tpu_custom_call.1} parent=5 // pred_region
        // Predicated region
        $region17: #{tpu_custom_call.1} parent=15 // pred_check
          %p182 = pneg %p51
        $region18: #{tpu_custom_call.1} parent=15 // pred_check_branch
          %184 = sbr.rel (%p182) target = $region20
        $region19: #{tpu_custom_call.1} parent=15 // pred_region
          %s185 = sand.u32 %s41, 1
          %s186 = scalar_lea.sflag [#allocation3], %s185
          %s187 = sand.u32 %s41, 1
          %s188 = smul.addr %s187, 8
          %s189 = scalar_lea.vmem [#allocation2], %s188
          %191 = vsyncadd %s186, 0
          %s192 = sadd.s32 %s25, %s24
          %s193 = smul.addr %s192, 8
          %s194 = scalar_lea.hbm %s0, %s193
          %s196 = sshll.u32 %s194, 4
          %s197 = int_to_ptr.hbm [resolvable:$true] %s196
          %s198 = sshll.u32 %s189, 4
          %s199 = int_to_ptr.vmem [resolvable:$true] %s198
          %201 = dma.hbm_to_vmem [thread:$0]  %s197, 128, %s199, %s186
        $region20: #{tpu_custom_call.1} parent=15 // pred_fallthru
          _
        // Predicated region
        $region21: #{tpu_custom_call.1} parent=15 // pred_check
          %p202 = pneg %p79
        $region22: #{tpu_custom_call.1} parent=15 // pred_check_branch
          %204 = sbr.rel (%p202) target = $region24
        $region23: #{tpu_custom_call.1} parent=15 // pred_region
          %s205 = sand.u32 %s69, 1
          %s206 = scalar_lea.sflag [#allocation5], %s205
          %s207 = sand.u32 %s69, 1
          %s208 = smul.addr %s207, 8
          %s209 = scalar_lea.vmem [#allocation4], %s208
          %211 = vsyncadd %s206, 0
          %s212 = sadd.s32 %s25, %s24
          %s213 = smul.addr %s212, 8
          %s214 = scalar_lea.hbm %s1, %s213
          %s216 = sshll.u32 %s214, 4
          %s217 = int_to_ptr.hbm [resolvable:$true] %s216
          %s218 = sshll.u32 %s209, 4
          %s219 = int_to_ptr.vmem [resolvable:$true] %s218
          %221 = dma.hbm_to_vmem [thread:$0]  %s217, 128, %s219, %s206
        $region24: #{tpu_custom_call.1} parent=15 // pred_fallthru
          _
      $region16: #{tpu_custom_call.1} parent=5 // pred_fallthru
        _
      %p222 = scmp.le.s32.totalorder 1, %s17
      %p223 = scmp.lt.s32.totalorder %s17, 3
      %p224 = pnand %p222, %p223
      %p225 = pneg %p224
      // Predicated region
      $region25: #{tpu_custom_call.1} parent=5 // pred_check
        _
      $region26: #{tpu_custom_call.1} parent=5 // pred_check_branch
        %227 = sbr.rel (%p224) target = $region28
      $region27: #{tpu_custom_call.1} parent=5 // pred_region
        %s228 = ssub.s32 %s17, 1
        %s229 = sand.u32 %s44, 1
        %s230 = scalar_lea.sflag [#allocation3], %s229
        %s231 = sand.u32 %s44, 1
        %s232 = smul.addr %s231, 8
        %s233 = scalar_lea.vmem [#allocation2], %s232
        // Predicated region
        $region29: #{tpu_custom_call.1} parent=27 // pred_check
          %p234 = pneg %p57
        $region30: #{tpu_custom_call.1} parent=27 // pred_check_branch
          %236 = sbr.rel (%p234) target = $region32
        $region31: #{tpu_custom_call.1} parent=27 // pred_region
          %238 = dma.done %s230, 128
        $region32: #{tpu_custom_call.1} parent=27 // pred_fallthru
          _
        %s239 = sand.u32 %s72, 1
        %s240 = scalar_lea.sflag [#allocation5], %s239
        %s241 = sand.u32 %s72, 1
        %s242 = smul.addr %s241, 8
        %s243 = scalar_lea.vmem [#allocation4], %s242
        // Predicated region
        $region33: #{tpu_custom_call.1} parent=27 // pred_check
          %p244 = pneg %p85
        $region34: #{tpu_custom_call.1} parent=27 // pred_check_branch
          %246 = sbr.rel (%p244) target = $region36
        $region35: #{tpu_custom_call.1} parent=27 // pred_region
          %248 = dma.done %s240, 128
        $region36: #{tpu_custom_call.1} parent=27 // pred_fallthru
          _
        %s249 = sand.u32 %s44, 1
        %s250 = scalar_lea.sflag [#allocation3], %s249
        %s251 = sand.u32 %s44, 1
        %s252 = smul.addr %s251, 8
        %s253 = scalar_lea.vmem [#allocation2], %s252
        %p254 = pneg %p57
        %p255 = pneg %p54
        %s256 = sand.u32 %s72, 1
        %s257 = scalar_lea.sflag [#allocation5], %s256
        %s258 = sand.u32 %s72, 1
        %s259 = smul.addr %s258, 8
        %s260 = scalar_lea.vmem [#allocation4], %s259
        %p261 = pneg %p85
        %p262 = pneg %p82
        %p263 = pneg %p111
        %p264 = pneg %p108
        %p265 = scmp.lt.s32.totalorder %s26, 1
        %s266 = scalar_select %p265, %s26, 1
        %s267 = smul.addr %s266, 8
        %s268 = scalar_lea.vmem %s2, %s267
        %p269 = pneg %p137
        %p270 = pneg %p134
        %p271 = scmp.lt.s32.totalorder %s26, 1
        %s272 = scalar_select %p271, %s26, 1
        %s273 = smul.addr %s272, 8
        %s274 = scalar_lea.vmem %s3, %s273
        %p275 = pneg %p163
        %p276 = pneg %p160
        %p277 = scmp.lt.s32.totalorder %s26, 1
        %s278 = scalar_select %p277, %s26, 1
        %s279 = smul.addr %s278, 8
        %s280 = scalar_lea.vmem %s4, %s279
        %p281 = scmp.lt.s32.totalorder %s26, 1
        %s282 = scalar_select %p281, %s26, 1
        %s283 = smul.addr %s282, 8
        %s284 = scalar_lea.vmem %s2, %s283
        %p285 = scmp.lt.s32.totalorder %s26, 1
        %s286 = scalar_select %p285, %s26, 1
        %s287 = smul.addr %s286, 8
        %s288 = scalar_lea.vmem %s3, %s287
        %p289 = scmp.lt.s32.totalorder %s26, 1
        %s290 = scalar_select %p289, %s26, 1
        %s291 = smul.addr %s290, 8
        %s292 = scalar_lea.vmem %s4, %s291
        %p293 = scmp.eq.s32.totalorder %s27, 0
        // Predicated region
        $region37: #{tpu_custom_call.1} parent=27 // pred_check
          %p294 = pneg %p293
        $region38: #{tpu_custom_call.1} parent=27 // pred_check_branch
          %296 = sbr.rel (%p294) target = $region40
        $region39: #{tpu_custom_call.1} parent=27 // pred_region
          %vm297 = vcmask 7168
          %298 = vst.msk [vmem:[%s284] sm:$0xff] %vm297, 0.0
          %299 = vst.msk [vmem:[%s288] sm:$0xff] %vm297, 0.0
          %300 = vst.msk [vmem:[%s292] sm:$0xff] %vm297, 0.0
        $region40: #{tpu_custom_call.1} parent=27 // pred_fallthru
          _
        %v301 = vld [vmem:[%s233] sm:$0xff]
        %v302 = vld [vmem:[%s243] sm:$0xff]
        %v303 = vand.u32 2147483647, %v301
        %v304 = vsub.f32 0.0, %v303
        %v305 = vmul.f32 %v304, 1.442695
        %v306 = vpow.pop %v305
        %v307 = vmax.f32 %v301, 0.0
        %v308 = vmul.f32 %v301, %v302
        %v309 = vsub.f32 %v307, %v308
        %v310 = vadd.f32 %v306, 1.0
        %v311 = vlog2.pop %v310
        %v312 = vmul.f32 %v311, 0.6931472
        %v313 = vmul.f32 -0.5, %v306
        %v314 = vadd.f32 %v313, 1.0
        %v315 = vmul.f32 %v314, %v306
        %v316 = vand.u32 2147483647, %v306
        %vm317 = vcmp.lt.f32.partialorder %v316, 0.0004427343
        %v318 = vsel %vm317, %v315, %v312
        %v319 = vadd.f32 %v309, %v318
        %v320 = vmul.f32 %v301, 0.5
        %v321 = vtanh.pop %v320
        %v322 = vmul.f32 %v321, 0.5
        %v323 = vadd.f32 %v322, 0.5
        %v324 = vld [vmem:[%s284] sm:$0xff]
        %325 = vadd.xlane.f32.xlu0 %v319
        %v326 = vpop.xlane.xlu0 %325
        %v327 = vadd.f32 %v324, %v326
        %vm328 = vcmask 7168
        %329 = vst.msk [vmem:[%s284] sm:$0xff] %vm328, %v327
        %v330 = vld [vmem:[%s288] sm:$0xff]
        %v331 = vmul.f32 %v323, %v302
        %332 = vadd.xlane.f32.xlu0 %v331
        %v333 = vpop.xlane.xlu0 %332
        %v334 = vadd.f32 %v330, %v333
        %335 = vst.msk [vmem:[%s288] sm:$0xff] %vm328, %v334
        %v336 = vld [vmem:[%s292] sm:$0xff]
        %v337 = vadd.f32 %v323, %v302
        %338 = vadd.xlane.f32.xlu0 %v337
        %v339 = vpop.xlane.xlu0 %338
        %v340 = vadd.f32 %v336, %v339
        %341 = vst.msk [vmem:[%s292] sm:$0xff] %vm328, %v340
        %p342 = scmp.lt.s32.totalorder %s26, 1
        %s343 = scalar_select %p342, %s26, 1
        %s344 = smul.addr %s343, 8
        %s345 = scalar_lea.vmem %s2, %s344
        %p346 = scmp.lt.s32.totalorder %s26, 1
        %s347 = scalar_select %p346, %s26, 1
        %s348 = smul.addr %s347, 8
        %s349 = scalar_lea.vmem %s3, %s348
        %p350 = scmp.lt.s32.totalorder %s26, 1
        %s351 = scalar_select %p350, %s26, 1
        %s352 = smul.addr %s351, 8
        %s353 = scalar_lea.vmem %s4, %s352
        // Predicated region
        $region41: #{tpu_custom_call.1} parent=27 // pred_check
          %p354 = pneg %p108
        $region42: #{tpu_custom_call.1} parent=27 // pred_check_branch
          %356 = sbr.rel (%p354) target = $region44
        $region43: #{tpu_custom_call.1} parent=27 // pred_region
          _
        $region44: #{tpu_custom_call.1} parent=27 // pred_fallthru
          _
        // Predicated region
        $region45: #{tpu_custom_call.1} parent=27 // pred_check
          %p357 = pneg %p134
        $region46: #{tpu_custom_call.1} parent=27 // pred_check_branch
          %359 = sbr.rel (%p357) target = $region48
        $region47: #{tpu_custom_call.1} parent=27 // pred_region
          _
        $region48: #{tpu_custom_call.1} parent=27 // pred_fallthru
          _
        // Predicated region
        $region49: #{tpu_custom_call.1} parent=27 // pred_check
          %p360 = pneg %p160
        $region50: #{tpu_custom_call.1} parent=27 // pred_check_branch
          %362 = sbr.rel (%p360) target = $region52
        $region51: #{tpu_custom_call.1} parent=27 // pred_region
          _
        $region52: #{tpu_custom_call.1} parent=27 // pred_fallthru
          _
      $region28: #{tpu_custom_call.1} parent=5 // pred_fallthru
        _
      %p363 = scmp.le.s32.totalorder 2, %s17
      // Predicated region
      $region53: #{tpu_custom_call.1} parent=5 // pred_check
        %p364 = pneg %p363
      $region54: #{tpu_custom_call.1} parent=5 // pred_check_branch
        %366 = sbr.rel (%p364) target = $region56
      $region55: #{tpu_custom_call.1} parent=5 // pred_region
        %s367 = ssub.s32 %s17, 2
        // Predicated region
        $region57: #{tpu_custom_call.1} parent=55 // pred_check
          %p368 = pneg %p114
        $region58: #{tpu_custom_call.1} parent=55 // pred_check_branch
          %370 = sbr.rel (%p368) target = $region60
        $region59: #{tpu_custom_call.1} parent=55 // pred_region
          %p371 = scmp.lt.s32.totalorder %s28, 1
          %s372 = scalar_select %p371, %s28, 1
          %s373 = smul.addr %s372, 8
          %s374 = scalar_lea.vmem %s2, %s373
        $region60: #{tpu_custom_call.1} parent=55 // pred_fallthru
          _
        // Predicated region
        $region61: #{tpu_custom_call.1} parent=55 // pred_check
          %p375 = pneg %p140
        $region62: #{tpu_custom_call.1} parent=55 // pred_check_branch
          %377 = sbr.rel (%p375) target = $region64
        $region63: #{tpu_custom_call.1} parent=55 // pred_region
          %p378 = scmp.lt.s32.totalorder %s28, 1
          %s379 = scalar_select %p378, %s28, 1
          %s380 = smul.addr %s379, 8
          %s381 = scalar_lea.vmem %s3, %s380
        $region64: #{tpu_custom_call.1} parent=55 // pred_fallthru
          _
        // Predicated region
        $region65: #{tpu_custom_call.1} parent=55 // pred_check
          %p382 = pneg %p166
        $region66: #{tpu_custom_call.1} parent=55 // pred_check_branch
          %384 = sbr.rel (%p382) target = $region68
        $region67: #{tpu_custom_call.1} parent=55 // pred_region
          %p385 = scmp.lt.s32.totalorder %s28, 1
          %s386 = scalar_select %p385, %s28, 1
          %s387 = smul.addr %s386, 8
          %s388 = scalar_lea.vmem %s4, %s387
        $region68: #{tpu_custom_call.1} parent=55 // pred_fallthru
          _
      $region56: #{tpu_custom_call.1} parent=5 // pred_fallthru
        _
    $region6: #{tpu_custom_call.1} parent=1 // loop_footer
      %s21 = sadd.s32 1, %s17
    $region7: #{tpu_custom_call.1} parent=1 // loop_footer_branch
      %16 = sbr.rel target = $region3
    $region8: #{tpu_custom_call.1} parent=1 // loop_exit
      _
    %389 = vsyncpa [#allocation3], 1
    %s390 = scalar_lea.sflag [#allocation3], 1
    %391 = vsyncpa %s390, 1
    %392 = vsyncpa [#allocation5], 1
    %s393 = scalar_lea.sflag [#allocation5], 1
    %394 = vsyncpa %s393, 1

</llo_original>
